<compile_context>
chip_gen: v6e
topology: v6e:2x2x1
jax: 0.10.0
libtpu: 0.0.40
codegen_flags: <defaults>
</compile_context>

<pallas_src>
import functools

import jax
import jax.numpy as jnp
from jax.experimental import pallas as pl
from jax.experimental.pallas import tpu as pltpu


def _round_up(x, m):
    return (x + m - 1) // m * m


def _ffn_kernel(x_ref, w1_ref, b1_ref, w3_ref, b3_ref, w2_ref, b2_ref,
                out_ref, acc_ref):
    """One (M-tile, H-tile) step of the SwiGLU FFN.

    grid = (M_tiles, H_tiles); the H axis is the reduction axis (last,
    "arbitrary"). f32 accumulation on the MXU, f32 elementwise gating.
    """
    h = pl.program_id(1)

    @pl.when(h == 0)
    def _init():
        acc_ref[...] = jnp.zeros_like(acc_ref)

    x = x_ref[...]  # already in the matmul dtype (bf16 by default)

    # gate / up projections for this hidden tile (f32 accumulation on MXU)
    h1 = jnp.dot(x, w1_ref[...], preferred_element_type=jnp.float32) + b1_ref[...]
    h3 = jnp.dot(x, w3_ref[...], preferred_element_type=jnp.float32) + b3_ref[...]

    # Silu(w1_o, w3_o) = silu(w1_o) * w3_o   -- kept in f32 (v5e-friendly)
    gated = (h1 * jax.nn.sigmoid(h1)) * h3

    # partial down-projection for this hidden tile, accumulated in f32 scratch
    acc_ref[...] += jnp.dot(gated.astype(w2_ref.dtype), w2_ref[...],
                            preferred_element_type=jnp.float32)

    @pl.when(h == pl.num_programs(1) - 1)
    def _finalize():
        out_ref[...] = (acc_ref[...] + b2_ref[...]).astype(out_ref.dtype)


@functools.partial(jax.jit, static_argnames=("tm", "th", "matmul_dtype"))
def base_feed_forward(x, w1, b1, w3, b3, w2, b2, *, tm=256, th=512,
                      matmul_dtype=jnp.bfloat16):
    """x: (batch, seq, in_features)  ->  (batch, seq, out_features)."""
    batch, seq, in_features = x.shape
    hidden = w1.shape[1]
    out_features = w2.shape[1]
    out_dtype = x.dtype

    mmdt = x.dtype if matmul_dtype is None else matmul_dtype
    mm_bytes = jnp.dtype(mmdt).itemsize
    out_bytes = jnp.dtype(out_dtype).itemsize

    M = batch * seq

    # ---- tile sizing / padding (all static Python ints) -------------------
    tm_eff = min(tm, _round_up(M, 16))          # big M tile, 16-row aligned
    Mp = _round_up(M, tm_eff)                   # pad rows -> no garbage tails
    th_eff = min(th, _round_up(hidden, 128))    # hidden tile, 128-lane aligned
    Hp = _round_up(hidden, th_eff)              # zero-pad hidden if needed
    out_p = _round_up(out_features, 128)        # lane-dense output stores

    # ---- wrapper-side layout plumbing / casts -----------------------------
    x2d = x.reshape(M, in_features).astype(mmdt)
    if Mp != M:
        x2d = jnp.pad(x2d, ((0, Mp - M), (0, 0)))

    w1p = jnp.pad(w1.astype(mmdt), ((0, 0), (0, Hp - hidden)))
    w3p = jnp.pad(w3.astype(mmdt), ((0, 0), (0, Hp - hidden)))
    b1p = jnp.pad(b1.astype(jnp.float32), (0, Hp - hidden)).reshape(1, Hp)
    b3p = jnp.pad(b3.astype(jnp.float32), (0, Hp - hidden)).reshape(1, Hp)
    w2p = jnp.pad(w2.astype(mmdt),
                  ((0, Hp - hidden), (0, out_p - out_features)))
    b2p = jnp.pad(b2.astype(jnp.float32),
                  (0, out_p - out_features)).reshape(1, out_p)

    grid = (Mp // tm_eff, Hp // th_eff)

    # ---- VMEM budget (double-buffered inputs/outputs + f32 accumulator) ---
    est = 2 * (tm_eff * in_features * mm_bytes          # x tile
               + 2 * in_features * th_eff * mm_bytes    # w1, w3 tiles
               + th_eff * out_p * mm_bytes              # w2 tile
               + 2 * 8 * th_eff * 4                     # b1, b3 (sublane pad)
               + 8 * out_p * 4                          # b2
               + tm_eff * out_p * out_bytes)            # out tile
    est += tm_eff * out_p * 4                           # acc scratch
    vmem_limit = int(min(64 * 2**20, max(32 * 2**20, int(1.5 * est) + (2 << 20))))

    out2d = pl.pallas_call(
        _ffn_kernel,
        out_shape=jax.ShapeDtypeStruct((Mp, out_p), out_dtype),
        grid_spec=pltpu.PrefetchScalarGridSpec(
            num_scalar_prefetch=0,
            grid=grid,
            in_specs=[
                pl.BlockSpec((tm_eff, in_features), lambda i, h: (i, 0)),  # x
                pl.BlockSpec((in_features, th_eff), lambda i, h: (0, h)),  # w1
                pl.BlockSpec((1, th_eff), lambda i, h: (0, h)),            # b1
                pl.BlockSpec((in_features, th_eff), lambda i, h: (0, h)),  # w3
                pl.BlockSpec((1, th_eff), lambda i, h: (0, h)),            # b3
                pl.BlockSpec((th_eff, out_p), lambda i, h: (h, 0)),        # w2
                pl.BlockSpec((1, out_p), lambda i, h: (0, 0)),             # b2
            ],
            out_specs=pl.BlockSpec((tm_eff, out_p), lambda i, h: (i, 0)),
            scratch_shapes=[pltpu.VMEM((tm_eff, out_p), jnp.float32)],
        ),
        compiler_params=pltpu.CompilerParams(
            dimension_semantics=("parallel", "arbitrary"),
            vmem_limit_bytes=vmem_limit),
    )(x2d, w1p, b1p, w3p, b3p, w2p, b2p)

    out2d = out2d[:M, :out_features]
    return out2d.reshape(batch, seq, out_features)


def _reference(x, w1, b1, w3, b3, w2, b2, matmul_dtype=jnp.bfloat16):
    """Pure-JAX reference with the same mixed-precision recipe as the kernel."""
    dt = x.dtype if matmul_dtype is None else matmul_dtype
    x2 = x.astype(dt)
    h1 = jnp.dot(x2, w1.astype(dt), preferred_element_type=jnp.float32) \
        + b1.astype(jnp.float32)
    h3 = jnp.dot(x2, w3.astype(dt), preferred_element_type=jnp.float32) \
        + b3.astype(jnp.float32)
    gated = (h1 * jax.nn.sigmoid(h1)) * h3
    out = jnp.dot(gated.astype(dt), w2.astype(dt),
                  preferred_element_type=jnp.float32) + b2.astype(jnp.float32)
    return out.astype(x.dtype)


if __name__ == "__main__":
    # Module config (small but consistent with __init__ semantics):
    #   in_features=32, hidden_features=200 -> rounded up to multiple_of=256,
    #   out_features=32, bias=True.
    # TODO(synk): process_group / column_cls / row_cls tensor-parallel sharding
    #             is not modeled; this is the single-device forward pass.
    in_features = 32
    hidden_features = 200
    multiple_of = 256
    hidden = multiple_of * ((hidden_features + multiple_of - 1) // multiple_of)  # 256
    out_features = 32

    batch, seq = 2, 8
    dtype = jnp.float32

    key = jax.random.PRNGKey(0)
    kx, k1, kb1, k3, kb3, k2, kb2 = jax.random.split(key, 7)

    x = jax.random.normal(kx, (batch, seq, in_features), dtype=dtype)

    # deterministic synthetic parameters (stored as (in_dim, out_dim))
    s1 = 1.0 / jnp.sqrt(jnp.float32(in_features))
    s2 = 1.0 / jnp.sqrt(jnp.float32(hidden))
    w1 = jax.random.uniform(k1, (in_features, hidden), dtype, -s1, s1)
    b1 = jax.random.uniform(kb1, (hidden,), dtype, -s1, s1)
    w3 = jax.random.uniform(k3, (in_features, hidden), dtype, -s1, s1)
    b3 = jax.random.uniform(kb3, (hidden,), dtype, -s1, s1)
    w2 = jax.random.uniform(k2, (hidden, out_features), dtype, -s2, s2)
    b2 = jax.random.uniform(kb2, (out_features,), dtype, -s2, s2)

    out = base_feed_forward(x, w1, b1, w3, b3, w2, b2)
    out = jax.block_until_ready(out)

    ref = _reference(x, w1, b1, w3, b3, w2, b2)
    assert out.shape == (batch, seq, out_features)
    assert jnp.allclose(out, ref, atol=2e-3, rtol=2e-3), "mismatch vs reference"

    print("KERNEL_OK")
</pallas_src>

<mosaic_0001>
module attributes {stable_mosaic.version = 11 : i64} {
  func.func @_ffn_kernel(%arg0: i32, %arg1: i32, %arg2: memref<16x32xbf16, #tpu.memory_space<vmem>>, %arg3: memref<32x256xbf16, #tpu.memory_space<vmem>>, %arg4: memref<1x256xf32, #tpu.memory_space<vmem>>, %arg5: memref<32x256xbf16, #tpu.memory_space<vmem>>, %arg6: memref<1x256xf32, #tpu.memory_space<vmem>>, %arg7: memref<256x128xbf16, #tpu.memory_space<vmem>>, %arg8: memref<1x128xf32, #tpu.memory_space<vmem>>, %arg9: memref<16x128xf32, #tpu.memory_space<vmem>>, %arg10: memref<16x128xf32, #tpu.memory_space<vmem>>) attributes {dimension_semantics = [#tpu.dimension_semantics<parallel>, #tpu.dimension_semantics<arbitrary>], iteration_bounds = array<i64: 1, 1>, scalar_prefetch = 0 : i64, scratch_operands = 1 : i64, tpu.core_type = #tpu.core_type<tc>, window_params = [{transform_indices = @transform_0, window_bounds = array<i64: 16, 32>}, {transform_indices = @transform_1, window_bounds = array<i64: 32, 256>}, {transform_indices = @transform_2, window_bounds = array<i64: 1, 256>}, {transform_indices = @transform_3, window_bounds = array<i64: 32, 256>}, {transform_indices = @transform_4, window_bounds = array<i64: 1, 256>}, {transform_indices = @transform_5, window_bounds = array<i64: 256, 128>}, {pipeline_mode = #tpu.pipeline_mode<synchronous>, transform_indices = @transform_6, window_bounds = array<i64: 1, 128>}, {transform_indices = @transform_7, window_bounds = array<i64: 16, 128>}]} {
    %c0_i32 = arith.constant 0 : i32
    %0 = arith.cmpi eq, %arg1, %c0_i32 : i32
    %1 = arith.extui %0 : i1 to i32
    %c0_i32_0 = arith.constant 0 : i32
    %2 = arith.cmpi ne, %1, %c0_i32_0 : i32
    scf.if %2 {
      %cst_21 = arith.constant 0.000000e+00 : f32
      %30 = vector.broadcast %cst_21 : f32 to vector<16x128xf32>
      %c0_22 = arith.constant 0 : index
      %c0_23 = arith.constant 0 : index
      %31 = vector.load %arg10[%c0_22, %c0_23] : memref<16x128xf32, #tpu.memory_space<vmem>>, vector<16x128xf32>
      tpu.vector_store %arg10[%c0_22, %c0_23], %30 {strides = array<i32>} : memref<16x128xf32, #tpu.memory_space<vmem>>, vector<16x128xf32>,
    } else {
    }
    %c0 = arith.constant 0 : index
    %c0_1 = arith.constant 0 : index
    %3 = vector.load %arg2[%c0, %c0_1] : memref<16x32xbf16, #tpu.memory_space<vmem>>, vector<16x32xbf16>
    %c0_2 = arith.constant 0 : index
    %c0_3 = arith.constant 0 : index
    %4 = vector.load %arg3[%c0_2, %c0_3] : memref<32x256xbf16, #tpu.memory_space<vmem>>, vector<32x256xbf16>
    %cst = arith.constant dense<0.000000e+00> : vector<16x256xf32>
    %5 = tpu.matmul %3, %4, %cst {dimension_numbers = #tpu.dot_dimension_numbers<[1], [0], [0], [1], [0, 0, 1, 1], [], []>} : vector<16x32xbf16>, vector<32x256xbf16>, vector<16x256xf32> -> vector<16x256xf32>
    %c0_4 = arith.constant 0 : index
    %c0_5 = arith.constant 0 : index
    %6 = vector.load %arg4[%c0_4, %c0_5] : memref<1x256xf32, #tpu.memory_space<vmem>>, vector<1x256xf32>
    %7 = vector.broadcast %6 : vector<1x256xf32> to vector<16x256xf32>
    %8 = arith.addf %5, %7 : vector<16x256xf32>
    %c0_6 = arith.constant 0 : index
    %c0_7 = arith.constant 0 : index
    %9 = vector.load %arg5[%c0_6, %c0_7] : memref<32x256xbf16, #tpu.memory_space<vmem>>, vector<32x256xbf16>
    %cst_8 = arith.constant dense<0.000000e+00> : vector<16x256xf32>
    %10 = tpu.matmul %3, %9, %cst_8 {dimension_numbers = #tpu.dot_dimension_numbers<[1], [0], [0], [1], [0, 0, 1, 1], [], []>} : vector<16x32xbf16>, vector<32x256xbf16>, vector<16x256xf32> -> vector<16x256xf32>
    %c0_9 = arith.constant 0 : index
    %c0_10 = arith.constant 0 : index
    %11 = vector.load %arg6[%c0_9, %c0_10] : memref<1x256xf32, #tpu.memory_space<vmem>>, vector<1x256xf32>
    %12 = vector.broadcast %11 : vector<1x256xf32> to vector<16x256xf32>
    %13 = arith.addf %10, %12 : vector<16x256xf32>
    %14 = arith.negf %8 : vector<16x256xf32>
    %15 = math.exp %14 : vector<16x256xf32>
    %cst_11 = arith.constant 1.000000e+00 : f32
    %16 = vector.broadcast %cst_11 : f32 to vector<16x256xf32>
    %17 = arith.addf %16, %15 : vector<16x256xf32>
    %18 = arith.divf %16, %17 : vector<16x256xf32>
    %19 = arith.mulf %8, %18 : vector<16x256xf32>
    %20 = arith.mulf %19, %13 : vector<16x256xf32>
    %c0_12 = arith.constant 0 : index
    %c0_13 = arith.constant 0 : index
    %21 = vector.load %arg10[%c0_12, %c0_13] : memref<16x128xf32, #tpu.memory_space<vmem>>, vector<16x128xf32>
    %22 = arith.truncf %20 : vector<16x256xf32> to vector<16x256xbf16>
    %c0_14 = arith.constant 0 : index
    %c0_15 = arith.constant 0 : index
    %23 = vector.load %arg7[%c0_14, %c0_15] : memref<256x128xbf16, #tpu.memory_space<vmem>>, vector<256x128xbf16>
    %cst_16 = arith.constant dense<0.000000e+00> : vector<16x128xf32>
    %24 = tpu.matmul %22, %23, %cst_16 {dimension_numbers = #tpu.dot_dimension_numbers<[1], [0], [0], [1], [0, 0, 1, 1], [], []>} : vector<16x256xbf16>, vector<256x128xbf16>, vector<16x128xf32> -> vector<16x128xf32>
    %25 = arith.addf %21, %24 : vector<16x128xf32>
    %c0_17 = arith.constant 0 : index
    %c0_18 = arith.constant 0 : index
    %26 = vector.load %arg10[%c0_17, %c0_18] : memref<16x128xf32, #tpu.memory_space<vmem>>, vector<16x128xf32>
    tpu.vector_store %arg10[%c0_17, %c0_18], %25 {strides = array<i32>} : memref<16x128xf32, #tpu.memory_space<vmem>>, vector<16x128xf32>,
    %c0_i32_19 = arith.constant 0 : i32
    %27 = arith.cmpi eq, %arg1, %c0_i32_19 : i32
    %28 = arith.extui %27 : i1 to i32
    %c0_i32_20 = arith.constant 0 : i32
    %29 = arith.cmpi ne, %28, %c0_i32_20 : i32
    scf.if %29 {
      %c0_21 = arith.constant 0 : index
      %c0_22 = arith.constant 0 : index
      %30 = vector.load %arg10[%c0_21, %c0_22] : memref<16x128xf32, #tpu.memory_space<vmem>>, vector<16x128xf32>
      %c0_23 = arith.constant 0 : index
      %c0_24 = arith.constant 0 : index
      %31 = vector.load %arg8[%c0_23, %c0_24] : memref<1x128xf32, #tpu.memory_space<vmem>>, vector<1x128xf32>
      %32 = vector.broadcast %31 : vector<1x128xf32> to vector<16x128xf32>
      %33 = arith.addf %30, %32 : vector<16x128xf32>
      %c0_25 = arith.constant 0 : index
      %c0_26 = arith.constant 0 : index
      %34 = vector.load %arg9[%c0_25, %c0_26] : memref<16x128xf32, #tpu.memory_space<vmem>>, vector<16x128xf32>
      tpu.vector_store %arg9[%c0_25, %c0_26], %33 {strides = array<i32>} : memref<16x128xf32, #tpu.memory_space<vmem>>, vector<16x128xf32>,
    } else {
    }
    return
  }
  func.func @transform_0(%arg0: i32, %arg1: i32) -> (i32, i32) {
    %c0_i32 = arith.constant 0 : i32
    %c0_i32_0 = arith.constant 0 : i32
    return %arg0, %c0_i32 : i32, i32
  }
  func.func @transform_1(%arg0: i32, %arg1: i32) -> (i32, i32) {
    %c0_i32 = arith.constant 0 : i32
    %c0_i32_0 = arith.constant 0 : i32
    return %c0_i32, %arg1 : i32, i32
  }
  func.func @transform_2(%arg0: i32, %arg1: i32) -> (i32, i32) {
    %c0_i32 = arith.constant 0 : i32
    %c0_i32_0 = arith.constant 0 : i32
    return %c0_i32, %arg1 : i32, i32
  }
  func.func @transform_3(%arg0: i32, %arg1: i32) -> (i32, i32) {
    %c0_i32 = arith.constant 0 : i32
    %c0_i32_0 = arith.constant 0 : i32
    return %c0_i32, %arg1 : i32, i32
  }
  func.func @transform_4(%arg0: i32, %arg1: i32) -> (i32, i32) {
    %c0_i32 = arith.constant 0 : i32
    %c0_i32_0 = arith.constant 0 : i32
    return %c0_i32, %arg1 : i32, i32
  }
  func.func @transform_5(%arg0: i32, %arg1: i32) -> (i32, i32) {
    %c0_i32 = arith.constant 0 : i32
    %c0_i32_0 = arith.constant 0 : i32
    return %arg1, %c0_i32 : i32, i32
  }
  func.func @transform_6(%arg0: i32, %arg1: i32) -> (i32, i32) {
    %c0_i32 = arith.constant 0 : i32
    %c0_i32_0 = arith.constant 0 : i32
    %c0_i32_1 = arith.constant 0 : i32
    return %c0_i32, %c0_i32_0 : i32, i32
  }
  func.func @transform_7(%arg0: i32, %arg1: i32) -> (i32, i32) {
    %c0_i32 = arith.constant 0 : i32
    %c0_i32_0 = arith.constant 0 : i32
    return %arg0, %c0_i32 : i32, i32
  }
}

</mosaic_0001>

<llo_original>
// kernel: base_feed_forward.1
$region0: #{base_feed_forward.1}
  #allocation0 [shape = 'u32[]', space=smem, size = 0x4, offset = 0x4, fixed_abs, tag = 'smem constant byte address 0x4 - core index']
  #allocation1 [shape = 'u32[144,128]{1,0:T(1,128)}', space=vmem, size = 0x12000, scoped, tag = 'internal scratch']
  #allocation2 [shape = 'f32[16,128]{1,0:T(8,128)}', space=vmem, size = 0x2000, scoped, tag = 'scratch operand']
  %s0 = inlined_call_operand.vmem [shape: bf16[16,32], index: 0, kind: input, shape index: {}]
  %s1 = inlined_call_operand.vmem [shape: bf16[32,256], index: 1, kind: input, shape index: {}]
  %s2 = inlined_call_operand.vmem [shape: f32[1,256], index: 2, kind: input, shape index: {}]
  %s3 = inlined_call_operand.vmem [shape: bf16[32,256], index: 3, kind: input, shape index: {}]
  %s4 = inlined_call_operand.vmem [shape: f32[1,256], index: 4, kind: input, shape index: {}]
  %s5 = inlined_call_operand.vmem [shape: bf16[256,128], index: 5, kind: input, shape index: {}]
  %s6 = inlined_call_operand.vmem [shape: f32[1,128], index: 6, kind: input, shape index: {}]
  %s7 = inlined_call_operand.vmem [shape: f32[16,128], index: 7, kind: output, shape index: {}]
  %s8 = sld [smem:[#allocation0]]
  $region46: #{base_feed_forward.1} parent=0
    _
  %s10 = ssub.s32 1, %s8
  %s11 = scalar_select 0, %s10, %s8
  // Predicated region
  $region2: #{base_feed_forward.1} parent=0 // pred_check
    _
  $region3: #{base_feed_forward.1} parent=0 // pred_check_branch
    %13 = sbr.rel (0) target = $region5
  $region4: #{base_feed_forward.1} parent=0 // pred_region
    _
  $region5: #{base_feed_forward.1} parent=0 // pred_fallthru
    _
  // Predicated region
  $region6: #{base_feed_forward.1} parent=0 // pred_check
    _
  $region7: #{base_feed_forward.1} parent=0 // pred_check_branch
    %15 = sbr.rel (0) target = $region9
  $region8: #{base_feed_forward.1} parent=0 // pred_region
    _
  $region9: #{base_feed_forward.1} parent=0 // pred_fallthru
    _
  // Predicated region
  $region10: #{base_feed_forward.1} parent=0 // pred_check
    _
  $region11: #{base_feed_forward.1} parent=0 // pred_check_branch
    %17 = sbr.rel (0) target = $region13
  $region12: #{base_feed_forward.1} parent=0 // pred_region
    _
  $region13: #{base_feed_forward.1} parent=0 // pred_fallthru
    _
  // Predicated region
  $region14: #{base_feed_forward.1} parent=0 // pred_check
    _
  $region15: #{base_feed_forward.1} parent=0 // pred_check_branch
    %19 = sbr.rel (0) target = $region17
  $region16: #{base_feed_forward.1} parent=0 // pred_region
    _
  $region17: #{base_feed_forward.1} parent=0 // pred_fallthru
    _
  // Predicated region
  $region18: #{base_feed_forward.1} parent=0 // pred_check
    _
  $region19: #{base_feed_forward.1} parent=0 // pred_check_branch
    %21 = sbr.rel (0) target = $region21
  $region20: #{base_feed_forward.1} parent=0 // pred_region
    _
  $region21: #{base_feed_forward.1} parent=0 // pred_fallthru
    _
  // Predicated region
  $region22: #{base_feed_forward.1} parent=0 // pred_check
    _
  $region23: #{base_feed_forward.1} parent=0 // pred_check_branch
    %23 = sbr.rel (0) target = $region25
  $region24: #{base_feed_forward.1} parent=0 // pred_region
    _
  $region25: #{base_feed_forward.1} parent=0 // pred_fallthru
    _
  // Predicated region
  $region26: #{base_feed_forward.1} parent=0 // pred_check
    _
  $region27: #{base_feed_forward.1} parent=0 // pred_check_branch
    %25 = sbr.rel (0) target = $region29
  $region28: #{base_feed_forward.1} parent=0 // pred_region
    _
  $region29: #{base_feed_forward.1} parent=0 // pred_fallthru
    _
  %p27 = scmp.eq.s32.totalorder 0, 0
  // Predicated region
  $region30: #{base_feed_forward.1} parent=0 // pred_check
    %p28 = pneg %p27
  $region31: #{base_feed_forward.1} parent=0 // pred_check_branch
    %30 = sbr.rel (%p28) target = $region33
  $region32: #{base_feed_forward.1} parent=0 // pred_region
    %31 = vst [vmem:[#allocation2] sm:$0xff] 0.0
    %32 = vst [vmem:[#allocation2 + $0x8] sm:$0xff] 0.0
  $region33: #{base_feed_forward.1} parent=0 // pred_fallthru
    _
  %v33 = vld [vmem:[%s0] sm:$0xf]
  %v34 = vld [vmem:[%s0 + $0x4] sm:$0xf]
  %v35 = vld [vmem:[%s1] sm:$0xff]
  %v36 = vld [vmem:[%s1 + $0x8] sm:$0xff]
  %v37 = vld [vmem:[%s1 + $0x10] sm:$0xff]
  %v38 = vld [vmem:[%s1 + $0x18] sm:$0xff]
  %v39 = vld [vmem:[%s2] sm:$0x3]
  %v41 = vlaneseq
  %v42 = vshrl.u32 %v41, 7
  %v43 = vsub.s32 0, %v42
  %v44 = vrot.slane %v39, %v43
  %v45 = vlaneseq
  %v46 = vshrl.u32 %v45, 7
  %v47 = vsub.s32 1, %v46
  %v48 = vrot.slane %v39, %v47
  %v53 = vunpack.c.l.b16 %v33
  %v54 = vunpack.c.l.b16 %v34
  %v55 = vpack.c.b16 %v54, %v53
  %v60 = vunpack.c.l.b16 %v35
  %v61 = vunpack.c.h.b16 %v35
  %v62 = vunpack.c.l.b16 %v36
  %v63 = vunpack.c.h.b16 %v36
  %v64 = vunpack.c.l.b16 %v37
  %v65 = vunpack.c.h.b16 %v37
  %v66 = vunpack.c.l.b16 %v38
  %v67 = vunpack.c.h.b16 %v38
  %v68 = vpack.c.b16 %v62, %v60
  %v69 = vpack.c.b16 %v63, %v61
  %v70 = vpack.c.b16 %v66, %v64
  %v71 = vpack.c.b16 %v67, %v65
  %vm76 = vcmask 261120
  %v78 = vsel %vm76, %v55, 0
  %80 = vmatprep.subr.bf16.mxu0 0
  %81 = vmatpush1.bf16.msra.mxu0 0
  %82 = vmatprep.subr.bf16.mxu0 0
  %83 = vmatpush1.bf16.msra.mxu0 0
  %84 = vmatprep.subr.bf16.mxu0 0
  %85 = vmatpush1.bf16.msra.mxu0 0
  %86 = vmatprep.subr.bf16.mxu0 0
  %87 = vmatpush1.bf16.msra.mxu0 0
  %88 = vmatprep.subr.bf16.mxu0 0
  %89 = vmatpush1.bf16.msra.mxu0 0
  %90 = vmatprep.subr.bf16.mxu0 0
  %91 = vmatpush1.bf16.msra.mxu0 0
  %92 = vmatprep.subr.bf16.mxu0 %v71
  %93 = vmatpush1.bf16.msra.mxu0 %v70
  %94 = vmatprep.subr.bf16.mxu0 %v69
  %95 = vmatpush1.bf16.msra.mxu0 %v68
  %96 = vmatprep.subr.bf16.mxu0 0
  %97 = vmatpush2.bf16.msra.mxu0 0
  %98 = vmatprep.subr.bf16.mxu0 0
  %99 = vmatpush2.bf16.msra.mxu0 0
  %100 = vmatprep.subr.bf16.mxu0 0
  %101 = vmatpush2.bf16.msra.mxu0 0
  %102 = vmatprep.subr.bf16.mxu0 0
  %103 = vmatpush2.bf16.msra.mxu0 0
  %104 = vmatprep.subr.bf16.mxu0 0
  %105 = vmatpush2.bf16.msra.mxu0 0
  %106 = vmatprep.subr.bf16.mxu0 0
  %107 = vmatpush2.bf16.msra.mxu0 0
  %108 = vmatprep.subr.bf16.mxu0 0
  %109 = vmatpush2.bf16.msra.mxu0 0
  %110 = vmatprep.subr.bf16.mxu0 0
  %111 = vmatpush2.bf16.msra.mxu0 0
  %112 = vmatprep.mubr.bf16.mxu0 0
  %113 = vmatmul.mubr.bf16.gmra.mxu0 %v78
  %v114 = vpop.f32.mrf.mxu0
  %v115 = vadd.f32 %v44, %v114
  %v116 = vpop.f32.mrf.mxu0
  %v117 = vadd.f32 %v48, %v116
  %v118 = vpop.f32.mrf.mxu0
  %v119 = vadd.f32 %v44, %v118
  %v120 = vpop.f32.mrf.mxu0
  %v121 = vadd.f32 %v48, %v120
  %122 = vdwg.mxu0
  %v123 = vld [vmem:[%s3] sm:$0xff]
  %v124 = vld [vmem:[%s3 + $0x8] sm:$0xff]
  %v125 = vld [vmem:[%s3 + $0x10] sm:$0xff]
  %v126 = vld [vmem:[%s3 + $0x18] sm:$0xff]
  %v127 = vld [vmem:[%s4] sm:$0x3]
  %v129 = vlaneseq
  %v130 = vshrl.u32 %v129, 7
  %v131 = vsub.s32 0, %v130
  %v132 = vrot.slane %v127, %v131
  %v133 = vlaneseq
  %v134 = vshrl.u32 %v133, 7
  %v135 = vsub.s32 1, %v134
  %v136 = vrot.slane %v127, %v135
  %v143 = vunpack.c.l.b16 %v123
  %v144 = vunpack.c.h.b16 %v123
  %v145 = vunpack.c.l.b16 %v124
  %v146 = vunpack.c.h.b16 %v124
  %v147 = vunpack.c.l.b16 %v125
  %v148 = vunpack.c.h.b16 %v125
  %v149 = vunpack.c.l.b16 %v126
  %v150 = vunpack.c.h.b16 %v126
  %v151 = vpack.c.b16 %v145, %v143
  %v152 = vpack.c.b16 %v146, %v144
  %v153 = vpack.c.b16 %v149, %v147
  %v154 = vpack.c.b16 %v150, %v148
  %159 = vmatprep.subr.bf16.mxu0 0
  %160 = vmatpush1.bf16.msra.mxu0 0
  %161 = vmatprep.subr.bf16.mxu0 0
  %162 = vmatpush1.bf16.msra.mxu0 0
  %163 = vmatprep.subr.bf16.mxu0 0
  %164 = vmatpush1.bf16.msra.mxu0 0
  %165 = vmatprep.subr.bf16.mxu0 0
  %166 = vmatpush1.bf16.msra.mxu0 0
  %167 = vmatprep.subr.bf16.mxu0 0
  %168 = vmatpush1.bf16.msra.mxu0 0
  %169 = vmatprep.subr.bf16.mxu0 0
  %170 = vmatpush1.bf16.msra.mxu0 0
  %171 = vmatprep.subr.bf16.mxu0 %v154
  %172 = vmatpush1.bf16.msra.mxu0 %v153
  %173 = vmatprep.subr.bf16.mxu0 %v152
  %174 = vmatpush1.bf16.msra.mxu0 %v151
  %175 = vmatprep.subr.bf16.mxu0 0
  %176 = vmatpush2.bf16.msra.mxu0 0
  %177 = vmatprep.subr.bf16.mxu0 0
  %178 = vmatpush2.bf16.msra.mxu0 0
  %179 = vmatprep.subr.bf16.mxu0 0
  %180 = vmatpush2.bf16.msra.mxu0 0
  %181 = vmatprep.subr.bf16.mxu0 0
  %182 = vmatpush2.bf16.msra.mxu0 0
  %183 = vmatprep.subr.bf16.mxu0 0
  %184 = vmatpush2.bf16.msra.mxu0 0
  %185 = vmatprep.subr.bf16.mxu0 0
  %186 = vmatpush2.bf16.msra.mxu0 0
  %187 = vmatprep.subr.bf16.mxu0 0
  %188 = vmatpush2.bf16.msra.mxu0 0
  %189 = vmatprep.subr.bf16.mxu0 0
  %190 = vmatpush2.bf16.msra.mxu0 0
  %191 = vmatprep.mubr.bf16.mxu0 0
  %192 = vmatmul.mubr.bf16.gmra.mxu0 %v78
  %v193 = vpop.f32.mrf.mxu0
  %v194 = vadd.f32 %v132, %v193
  %v195 = vpop.f32.mrf.mxu0
  %v196 = vadd.f32 %v136, %v195
  %v197 = vpop.f32.mrf.mxu0
  %v198 = vadd.f32 %v132, %v197
  %v199 = vpop.f32.mrf.mxu0
  %v200 = vadd.f32 %v136, %v199
  %201 = vdwg.mxu0
  %v202 = vxor.u32 %v115, 2147483648
  %v203 = vxor.u32 %v117, 2147483648
  %v204 = vxor.u32 %v119, 2147483648
  %v205 = vxor.u32 %v121, 2147483648
  %v206 = vmul.f32 %v202, 1.442695
  %v207 = vpow.pop %v206
  %v208 = vmul.f32 %v203, 1.442695
  %v209 = vpow.pop %v208
  %v210 = vmul.f32 %v204, 1.442695
  %v211 = vpow.pop %v210
  %v212 = vmul.f32 %v205, 1.442695
  %v213 = vpow.pop %v212
  %v214 = vadd.f32 %v207, 1.0
  %v215 = vadd.f32 %v209, 1.0
  %v216 = vadd.f32 %v211, 1.0
  %v217 = vadd.f32 %v213, 1.0
  %v218 = vrcp.pop %v214
  %v219 = vmul.f32 1.0, %v218
  %v220 = vrcp.pop %v215
  %v221 = vmul.f32 1.0, %v220
  %v222 = vrcp.pop %v216
  %v223 = vmul.f32 1.0, %v222
  %v224 = vrcp.pop %v217
  %v225 = vmul.f32 1.0, %v224
  %v226 = vmul.f32 %v115, %v219
  %v227 = vmul.f32 %v117, %v221
  %v228 = vmul.f32 %v119, %v223
  %v229 = vmul.f32 %v121, %v225
  %v230 = vmul.f32 %v226, %v194
  %v231 = vmul.f32 %v227, %v196
  %v232 = vmul.f32 %v228, %v198
  %v233 = vmul.f32 %v229, %v200
  %v234 = vld [vmem:[#allocation2] sm:$0xff]
  %v235 = vld [vmem:[#allocation2 + $0x8] sm:$0xff]
  %v236 = vpack.c.bf16 %v232, %v230
  %v237 = vpack.c.bf16 %v233, %v231
  %v238 = vld [vmem:[%s5] sm:$0xf]
  %v239 = vld [vmem:[%s5 + $0x4] sm:$0xf]
  %v240 = vld [vmem:[%s5 + $0x8] sm:$0xf]
  %v241 = vld [vmem:[%s5 + $0xc] sm:$0xf]
  %v242 = vld [vmem:[%s5 + $0x10] sm:$0xf]
  %v243 = vld [vmem:[%s5 + $0x14] sm:$0xf]
  %v244 = vld [vmem:[%s5 + $0x18] sm:$0xf]
  %v245 = vld [vmem:[%s5 + $0x1c] sm:$0xf]
  %v246 = vld [vmem:[%s5 + $0x20] sm:$0xf]
  %v247 = vld [vmem:[%s5 + $0x24] sm:$0xf]
  %v248 = vld [vmem:[%s5 + $0x28] sm:$0xf]
  %v249 = vld [vmem:[%s5 + $0x2c] sm:$0xf]
  %v250 = vld [vmem:[%s5 + $0x30] sm:$0xf]
  %v251 = vld [vmem:[%s5 + $0x34] sm:$0xf]
  %v252 = vld [vmem:[%s5 + $0x38] sm:$0xf]
  %v253 = vld [vmem:[%s5 + $0x3c] sm:$0xf]
  %v254 = vld [vmem:[%s5 + $0x40] sm:$0xf]
  %v255 = vld [vmem:[%s5 + $0x44] sm:$0xf]
  %v256 = vld [vmem:[%s5 + $0x48] sm:$0xf]
  %v257 = vld [vmem:[%s5 + $0x4c] sm:$0xf]
  %v258 = vld [vmem:[%s5 + $0x50] sm:$0xf]
  %v259 = vld [vmem:[%s5 + $0x54] sm:$0xf]
  %v260 = vld [vmem:[%s5 + $0x58] sm:$0xf]
  %v261 = vld [vmem:[%s5 + $0x5c] sm:$0xf]
  %v262 = vld [vmem:[%s5 + $0x60] sm:$0xf]
  %v263 = vld [vmem:[%s5 + $0x64] sm:$0xf]
  %v264 = vld [vmem:[%s5 + $0x68] sm:$0xf]
  %v265 = vld [vmem:[%s5 + $0x6c] sm:$0xf]
  %v266 = vld [vmem:[%s5 + $0x70] sm:$0xf]
  %v267 = vld [vmem:[%s5 + $0x74] sm:$0xf]
  %v268 = vld [vmem:[%s5 + $0x78] sm:$0xf]
  %v269 = vld [vmem:[%s5 + $0x7c] sm:$0xf]
  %v302 = vunpack.c.l.b16 %v238
  %v303 = vunpack.c.l.b16 %v239
  %v304 = vunpack.c.l.b16 %v240
  %v305 = vunpack.c.l.b16 %v241
  %v306 = vunpack.c.l.b16 %v242
  %v307 = vunpack.c.l.b16 %v243
  %v308 = vunpack.c.l.b16 %v244
  %v309 = vunpack.c.l.b16 %v245
  %v310 = vunpack.c.l.b16 %v246
  %v311 = vunpack.c.l.b16 %v247
  %v312 = vunpack.c.l.b16 %v248
  %v313 = vunpack.c.l.b16 %v249
  %v314 = vunpack.c.l.b16 %v250
  %v315 = vunpack.c.l.b16 %v251
  %v316 = vunpack.c.l.b16 %v252
  %v317 = vunpack.c.l.b16 %v253
  %v318 = vunpack.c.l.b16 %v254
  %v319 = vunpack.c.l.b16 %v255
  %v320 = vunpack.c.l.b16 %v256
  %v321 = vunpack.c.l.b16 %v257
  %v322 = vunpack.c.l.b16 %v258
  %v323 = vunpack.c.l.b16 %v259
  %v324 = vunpack.c.l.b16 %v260
  %v325 = vunpack.c.l.b16 %v261
  %v326 = vunpack.c.l.b16 %v262
  %v327 = vunpack.c.l.b16 %v263
  %v328 = vunpack.c.l.b16 %v264
  %v329 = vunpack.c.l.b16 %v265
  %v330 = vunpack.c.l.b16 %v266
  %v331 = vunpack.c.l.b16 %v267
  %v332 = vunpack.c.l.b16 %v268
  %v333 = vunpack.c.l.b16 %v269
  %v334 = vpack.c.b16 %v303, %v302
  %v335 = vpack.c.b16 %v305, %v304
  %v336 = vpack.c.b16 %v307, %v306
  %v337 = vpack.c.b16 %v309, %v308
  %v338 = vpack.c.b16 %v311, %v310
  %v339 = vpack.c.b16 %v313, %v312
  %v340 = vpack.c.b16 %v315, %v314
  %v341 = vpack.c.b16 %v317, %v316
  %v342 = vpack.c.b16 %v319, %v318
  %v343 = vpack.c.b16 %v321, %v320
  %v344 = vpack.c.b16 %v323, %v322
  %v345 = vpack.c.b16 %v325, %v324
  %v346 = vpack.c.b16 %v327, %v326
  %v347 = vpack.c.b16 %v329, %v328
  %v348 = vpack.c.b16 %v331, %v330
  %v349 = vpack.c.b16 %v333, %v332
  %366 = vmatprep.subr.bf16.mxu0 0
  %367 = vmatpush1.bf16.msra.mxu0 %v341
  %368 = vmatprep.subr.bf16.mxu0 0
  %369 = vmatpush1.bf16.msra.mxu0 %v340
  %370 = vmatprep.subr.bf16.mxu0 0
  %371 = vmatpush1.bf16.msra.mxu0 %v339
  %372 = vmatprep.subr.bf16.mxu0 0
  %373 = vmatpush1.bf16.msra.mxu0 %v338
  %374 = vmatprep.subr.bf16.mxu0 0
  %375 = vmatpush1.bf16.msra.mxu0 %v337
  %376 = vmatprep.subr.bf16.mxu0 0
  %377 = vmatpush1.bf16.msra.mxu0 %v336
  %378 = vmatprep.subr.bf16.mxu0 0
  %379 = vmatpush1.bf16.msra.mxu0 %v335
  %380 = vmatprep.subr.bf16.mxu0 0
  %381 = vmatpush1.bf16.msra.mxu0 %v334
  %382 = vmatprep.subr.bf16.mxu0 0
  %383 = vmatpush2.bf16.msra.mxu0 %v349
  %384 = vmatprep.subr.bf16.mxu0 0
  %385 = vmatpush2.bf16.msra.mxu0 %v348
  %386 = vmatprep.subr.bf16.mxu0 0
  %387 = vmatpush2.bf16.msra.mxu0 %v347
  %388 = vmatprep.subr.bf16.mxu0 0
  %389 = vmatpush2.bf16.msra.mxu0 %v346
  %390 = vmatprep.subr.bf16.mxu0 0
  %391 = vmatpush2.bf16.msra.mxu0 %v345
  %392 = vmatprep.subr.bf16.mxu0 0
  %393 = vmatpush2.bf16.msra.mxu0 %v344
  %394 = vmatprep.subr.bf16.mxu0 0
  %395 = vmatpush2.bf16.msra.mxu0 %v343
  %396 = vmatprep.subr.bf16.mxu0 0
  %397 = vmatpush2.bf16.msra.mxu0 %v342
  %398 = vmatprep.mubr.bf16.mxu0 %v237
  %399 = vmatmul.mubr.bf16.gmra.mxu0 %v236
  %v400 = vpop.f32.mrf.mxu0
  %v401 = vadd.f32 0.0, %v400
  %v402 = vpop.f32.mrf.mxu0
  %v403 = vpop.f32.mrf.mxu0
  %v404 = vadd.f32 0.0, %v403
  %v405 = vpop.f32.mrf.mxu0
  %406 = vdwg.mxu0
  %v407 = vadd.f32 %v234, %v401
  %v408 = vadd.f32 %v235, %v404
  %409 = vst [vmem:[#allocation2] sm:$0xff] %v407
  %410 = vst [vmem:[#allocation2 + $0x8] sm:$0xff] %v408
  // Predicated region
  $region34: #{base_feed_forward.1} parent=0 // pred_check
    %p411 = pneg %p27
  $region35: #{base_feed_forward.1} parent=0 // pred_check_branch
    %413 = sbr.rel (%p411) target = $region37
  $region36: #{base_feed_forward.1} parent=0 // pred_region
    %v414 = vld [vmem:[#allocation2] sm:$0xff]
    %v415 = vld [vmem:[#allocation2 + $0x8] sm:$0xff]
    %v416 = vld [vmem:[%s6] sm:$0x1]
    %v418 = vlaneseq
    %v419 = vshrl.u32 %v418, 7
    %v420 = vsub.s32 0, %v419
    %v421 = vrot.slane %v416, %v420
    %v423 = vadd.f32 %v414, %v421
    %v424 = vadd.f32 %v415, %v421
    %425 = vst [vmem:[%s7] sm:$0xff] %v423
    %426 = vst [vmem:[%s7 + $0x8] sm:$0xff] %v424
  $region37: #{base_feed_forward.1} parent=0 // pred_fallthru
    _
  // Predicated region
  $region38: #{base_feed_forward.1} parent=0 // pred_check
    _
  $region39: #{base_feed_forward.1} parent=0 // pred_check_branch
    %428 = sbr.rel (0) target = $region41
  $region40: #{base_feed_forward.1} parent=0 // pred_region
    _
  $region41: #{base_feed_forward.1} parent=0 // pred_fallthru
    _
  // Predicated region
  $region42: #{base_feed_forward.1} parent=0 // pred_check
    _
  $region43: #{base_feed_forward.1} parent=0 // pred_check_branch
    %430 = sbr.rel (0) target = $region45
  $region44: #{base_feed_forward.1} parent=0 // pred_region
    _
  $region45: #{base_feed_forward.1} parent=0 // pred_fallthru
    _

</llo_original>
